<compile_context>
chip_gen: v5e
topology: v5e:2x2
jax: 0.10.0
libtpu: 0.0.40
codegen_flags: <defaults>
</compile_context>

<pallas_src>
import functools

import jax
import jax.numpy as jnp
from jax.experimental import pallas as pl
from jax.experimental.pallas import tpu as pltpu


# --------------------------------------------------------------------------- #
# Kernel
# --------------------------------------------------------------------------- #
def _llama_mlp_kernel(x_ref, w12_ref, b12_ref, wp_ref, bp_ref, o_ref, acc_ref):
    # grid = (M tiles, I tiles); the I axis is the reduction for the proj matmul.
    j = pl.program_id(1)

    @pl.when(j == 0)
    def _():
        acc_ref[...] = jnp.zeros_like(acc_ref)

    bi = wp_ref.shape[0]          # block_i (static)
    x = x_ref[...]                # native dtype; MXU accumulates in f32.

    # One fused up-projection dot: w12 tile is [W1 tile | W2 tile] along lanes.
    h = jnp.dot(x, w12_ref[...], preferred_element_type=jnp.float32)
    h = h + b12_ref[...].astype(jnp.float32)
    h1 = h[:, :bi]
    h2 = h[:, bi:]

    # SwiGLU gate in f32 (sigmoid goes to the EUP slot), then back to the
    # weight dtype so the proj matmul stays on the fast MXU path.
    gated = (h1 * jax.nn.sigmoid(h1)) * h2
    acc_ref[...] += jnp.dot(gated.astype(wp_ref.dtype), wp_ref[...],
                            preferred_element_type=jnp.float32)

    @pl.when(j == pl.num_programs(1) - 1)
    def _():
        o_ref[...] = (acc_ref[...] + bp_ref[...].astype(jnp.float32)).astype(o_ref.dtype)


# --------------------------------------------------------------------------- #
# Hardware-aware tile / VMEM-budget selection
# --------------------------------------------------------------------------- #
def _round_up(x, m):
    return ((x + m - 1) // m) * m


def _tpu_generation():
    """Return (generation tag, physical VMEM bytes per core, TensorCores/chip)."""
    kind = ""
    try:
        kind = jax.devices()[0].device_kind.lower()
    except Exception:
        pass
    if "v7" in kind:
        gen, vmem, n_tc = "v7x", 64 << 20, 2
    elif "v6" in kind:
        gen, vmem, n_tc = "v6e", 128 << 20, 1
    elif "v5" in kind:
        gen, vmem, n_tc = "v5e", 128 << 20, 1
    else:
        gen, vmem, n_tc = "other", 128 << 20, 1
    try:  # prefer the real number if the API exposes it
        cap = getattr(pltpu.get_tpu_info(), "vmem_capacity_bytes", None)
        if cap:
            vmem = int(cap)
    except Exception:
        pass
    return gen, vmem, n_tc


def _select_tiles(M, C, I, x_itemsize, w_itemsize, gen, vmem_cap, n_tc,
                  block_m=None, block_i=None):
    # Generation-aware caps (multiples of 256 for clean MXU passes).
    if gen == "v7x":
        cap_m, cap_i = 512, 256       # 64 MiB VMEM/TC -> smaller weight tiles
    elif gen == "v5e":
        cap_m, cap_i = 256, 512       # already compute-bound at 256 on v5e
    else:                             # v6e & unknown
        cap_m, cap_i = 1024, 512      # cross the HBM-weight roofline

    m_granule = 16 if x_itemsize < 4 else 8   # bf16 packs 2 rows / sublane

    if block_i is None:
        # Prefer an aligned divisor of I (avoids padding the big weights).
        block_i = None
        for t in range(cap_i, 0, -128):
            if I % t == 0:
                block_i = t
                break
        if block_i is None:
            block_i = cap_i            # fall back to padding I
    if block_m is None:
        block_m = cap_m if M >= cap_m else _round_up(M, m_granule)

    # v7x megacore: M is the only "parallel" grid axis — keep both TCs busy.
    if n_tc >= 2:
        while block_m >= 2 * m_granule and -(-M // block_m) < 2:
            block_m = _round_up(block_m // 2, m_granule)

    # Keep the double-buffered working set inside physical VMEM (minus headroom).
    budget = vmem_cap - (8 << 20)

    def est(bm, bi):
        return (2 * bm * C * x_itemsize            # x tile (double-buffered)
                + 2 * bm * C * x_itemsize          # out tile
                + 2 * C * 2 * bi * w_itemsize      # fused [W1|W2] tile
                + 2 * bi * C * w_itemsize          # Wp tile
                + 2 * (2 * bi + C) * w_itemsize    # bias tiles
                + bm * C * 4)                      # f32 accumulator scratch

    while est(block_m, block_i) * 1.1 > budget and block_m > 256:
        block_m = max(256, block_m // 2)
    while est(block_m, block_i) * 1.1 > budget and block_i > 128:
        block_i = max(128, block_i // 2)
    while est(block_m, block_i) * 1.1 > budget and block_m > 64:
        block_m = max(64, block_m // 2)

    e = est(block_m, block_i)
    vmem_limit = int(min(max(e * 3 // 2, 16 << 20), vmem_cap - (8 << 20)))
    vmem_limit = max(vmem_limit, int(e))   # never request less than the estimate
    return int(block_m), int(block_i), vmem_limit


# --------------------------------------------------------------------------- #
# Wrapper
# --------------------------------------------------------------------------- #
@functools.partial(jax.jit, static_argnames=("block_m", "block_i", "vmem_limit"))
def _llama_mlp_impl(x2d, w1, b1, w2, b2, wp, bp, *, block_m, block_i, vmem_limit):
    M, C = x2d.shape
    I = w1.shape[1]

    # Pad the token axis up to a tile (handles ragged B*T without asserts or
    # whole-M tiles); padded rows are sliced off below.
    M_pad = _round_up(M, block_m)
    if M_pad != M:
        x2d = jnp.pad(x2d, ((0, M_pad - M), (0, 0)))

    # Pad the intermediate axis if no aligned divisor existed; zero columns of
    # W1/W2 (and zero proj rows) contribute exactly zero to the output.
    I_pad = _round_up(I, block_i)
    if I_pad != I:
        pi = I_pad - I
        w1 = jnp.pad(w1, ((0, 0), (0, pi)))
        w2 = jnp.pad(w2, ((0, 0), (0, pi)))
        b1 = jnp.pad(b1, ((0, pi),))
        b2 = jnp.pad(b2, ((0, pi),))
        wp = jnp.pad(wp, ((0, pi), (0, 0)))

    nI = I_pad // block_i
    # Block-interleave W1|W2 (and b1|b2) so each grid step needs ONE up-proj
    # dot and ONE weight DMA.  In a real model this is a one-time weight-load
    # transform; it is kept here so the wrapper stays self-contained.
    w12 = jnp.concatenate(
        [w1.reshape(C, nI, block_i), w2.reshape(C, nI, block_i)], axis=2
    ).reshape(C, 2 * I_pad)
    b12 = jnp.concatenate(
        [b1.reshape(nI, block_i), b2.reshape(nI, block_i)], axis=1
    ).reshape(1, 2 * I_pad)
    bpr = bp.reshape(1, C)

    grid = (M_pad // block_m, I_pad // block_i)   # reduction axis (I) last

    # Advisory cost estimate so XLA schedules surrounding ops sensibly.
    w_bytes = 3 * C * I_pad * jnp.dtype(w1.dtype).itemsize
    cost = pl.CostEstimate(
        flops=6 * M_pad * C * I_pad,
        transcendentals=M_pad * I_pad,
        bytes_accessed=int(x2d.size * x2d.dtype.itemsize
                           + w_bytes * grid[0]          # weights re-streamed per M tile
                           + M_pad * C * x2d.dtype.itemsize),
    )

    out2d = pl.pallas_call(
        _llama_mlp_kernel,
        out_shape=jax.ShapeDtypeStruct((M_pad, C), x2d.dtype),
        grid_spec=pltpu.PrefetchScalarGridSpec(
            num_scalar_prefetch=0,
            grid=grid,
            in_specs=[
                pl.BlockSpec((block_m, C), lambda i, j: (i, 0)),        # x (const over j)
                pl.BlockSpec((C, 2 * block_i), lambda i, j: (0, j)),    # fused [W1|W2]
                pl.BlockSpec((1, 2 * block_i), lambda i, j: (0, j)),    # fused [b1|b2]
                pl.BlockSpec((block_i, C), lambda i, j: (j, 0)),        # Wp tile
                pl.BlockSpec((1, C), lambda i, j: (0, 0)),              # bp (invariant)
            ],
            out_specs=pl.BlockSpec((block_m, C), lambda i, j: (i, 0)),
            scratch_shapes=[pltpu.VMEM((block_m, C), jnp.float32)],
        ),
        compiler_params=pltpu.CompilerParams(
            dimension_semantics=("parallel", "arbitrary"),
            vmem_limit_bytes=vmem_limit,
        ),
        cost_estimate=cost,
    )(x2d, w12, b12, wp, bpr)

    return out2d[:M] if M_pad != M else out2d


def llama_mlp(x, w1, b1, w2, b2, wp, bp, *, block_m=None, block_i=None):
    """x: (B, T, C). Weights stored pre-transposed as (in, out); biases (out,)."""
    B, T, C = x.shape
    M = B * T
    I = w1.shape[1]

    gen, vmem_cap, n_tc = _tpu_generation()
    bm, bi, vmem_limit = _select_tiles(
        M, C, I,
        jnp.dtype(x.dtype).itemsize, jnp.dtype(w1.dtype).itemsize,
        gen, vmem_cap, n_tc, block_m=block_m, block_i=block_i)

    out2d = _llama_mlp_impl(x.reshape(M, C), w1, b1, w2, b2, wp, bp,
                            block_m=bm, block_i=bi, vmem_limit=vmem_limit)
    return out2d.reshape(B, T, C)


# --------------------------------------------------------------------------- #
# Reference + test
# --------------------------------------------------------------------------- #
def _reference(x, w1, b1, w2, b2, wp, bp):
    xf = x.astype(jnp.float32)
    h1 = xf @ w1.astype(jnp.float32) + b1
    h2 = xf @ w2.astype(jnp.float32) + b2
    g = (h1 * jax.nn.sigmoid(h1)) * h2
    return (g @ wp.astype(jnp.float32) + bp).astype(x.dtype)


if __name__ == "__main__":
    # Small but 128-aligned config consistent with LlamaMLP (n_embd=C,
    # intermediate_size=I, bias=True).
    B, T, C, I = 2, 8, 128, 256

    key = jax.random.PRNGKey(0)
    kx, k1, kb1, k2, kb2, kp, kbp = jax.random.split(key, 7)

    x = jax.random.normal(kx, (B, T, C), dtype=jnp.float32)

    # Deterministic PyTorch-Linear-like init; weights stored (in, out).
    def init_linear(kw, kb, fan_in, fan_out):
        bound = 1.0 / (fan_in ** 0.5)
        w = jax.random.uniform(kw, (fan_in, fan_out), jnp.float32, -bound, bound)
        b = jax.random.uniform(kb, (fan_out,), jnp.float32, -bound, bound)
        return w, b

    w1, b1 = init_linear(k1, kb1, C, I)   # fc_1
    w2, b2 = init_linear(k2, kb2, C, I)   # fc_2
    wp, bp = init_linear(kp, kbp, I, C)   # proj

    ref = _reference(x.reshape(-1, C), w1, b1, w2, b2, wp, bp).reshape(B, T, C)

    # 1) Explicit small tiles so both grid axes (M tiles x I tiles) are exercised.
    out = llama_mlp(x, w1, b1, w2, b2, wp, bp, block_m=8, block_i=128)
    out = jax.block_until_ready(out)
    assert out.shape == (B, T, C)
    assert jnp.allclose(out, ref, atol=1e-4, rtol=1e-4), "mismatch vs reference (explicit tiles)"

    # 2) Auto (generation-aware) tile selection path.
    out_auto = jax.block_until_ready(llama_mlp(x, w1, b1, w2, b2, wp, bp))
    assert jnp.allclose(out_auto, ref, atol=1e-4, rtol=1e-4), "mismatch vs reference (auto tiles)"

    print("KERNEL_OK")
</pallas_src>

<mosaic_0001>
module attributes {stable_mosaic.version = 11 : i64} {
  func.func @_llama_mlp_kernel(%arg0: i32, %arg1: i32, %arg2: memref<8x128xf32, #tpu.memory_space<vmem>>, %arg3: memref<128x256xf32, #tpu.memory_space<vmem>>, %arg4: memref<1x256xf32, #tpu.memory_space<vmem>>, %arg5: memref<128x128xf32, #tpu.memory_space<vmem>>, %arg6: memref<1x128xf32, #tpu.memory_space<vmem>>, %arg7: memref<8x128xf32, #tpu.memory_space<vmem>>, %arg8: memref<8x128xf32, #tpu.memory_space<vmem>>) attributes {dimension_semantics = [#tpu.dimension_semantics<parallel>, #tpu.dimension_semantics<arbitrary>], iteration_bounds = array<i64: 2, 2>, scalar_prefetch = 0 : i64, scratch_operands = 1 : i64, tpu.core_type = #tpu.core_type<tc>, window_params = [{transform_indices = @transform_0, window_bounds = array<i64: 8, 128>}, {transform_indices = @transform_1, window_bounds = array<i64: 128, 256>}, {transform_indices = @transform_2, window_bounds = array<i64: 1, 256>}, {transform_indices = @transform_3, window_bounds = array<i64: 128, 128>}, {pipeline_mode = #tpu.pipeline_mode<synchronous>, transform_indices = @transform_4, window_bounds = array<i64: 1, 128>}, {transform_indices = @transform_5, window_bounds = array<i64: 8, 128>}]} {
    %c0_i32 = arith.constant 0 : i32
    %0 = arith.cmpi eq, %arg1, %c0_i32 : i32
    %1 = arith.extui %0 : i1 to i32
    %c0_i32_0 = arith.constant 0 : i32
    %2 = arith.cmpi ne, %1, %c0_i32_0 : i32
    scf.if %2 {
      %cst_15 = arith.constant 0.000000e+00 : f32
      %26 = vector.broadcast %cst_15 : f32 to vector<8x128xf32>
      %c0_16 = arith.constant 0 : index
      %c0_17 = arith.constant 0 : index
      %27 = vector.load %arg8[%c0_16, %c0_17] : memref<8x128xf32, #tpu.memory_space<vmem>>, vector<8x128xf32>
      tpu.vector_store %arg8[%c0_16, %c0_17], %26 {strides = array<i32>} : memref<8x128xf32, #tpu.memory_space<vmem>>, vector<8x128xf32>,
    } else {
    }
    %c0 = arith.constant 0 : index
    %c0_1 = arith.constant 0 : index
    %3 = vector.load %arg2[%c0, %c0_1] : memref<8x128xf32, #tpu.memory_space<vmem>>, vector<8x128xf32>
    %c0_2 = arith.constant 0 : index
    %c0_3 = arith.constant 0 : index
    %4 = vector.load %arg3[%c0_2, %c0_3] : memref<128x256xf32, #tpu.memory_space<vmem>>, vector<128x256xf32>
    %cst = arith.constant dense<0.000000e+00> : vector<8x256xf32>
    %5 = tpu.matmul %3, %4, %cst {dimension_numbers = #tpu.dot_dimension_numbers<[1], [0], [0], [1], [0, 0, 1, 1], [], []>} : vector<8x128xf32>, vector<128x256xf32>, vector<8x256xf32> -> vector<8x256xf32>
    %c0_4 = arith.constant 0 : index
    %c0_5 = arith.constant 0 : index
    %6 = vector.load %arg4[%c0_4, %c0_5] : memref<1x256xf32, #tpu.memory_space<vmem>>, vector<1x256xf32>
    %7 = vector.broadcast %6 : vector<1x256xf32> to vector<8x256xf32>
    %8 = arith.addf %5, %7 : vector<8x256xf32>
    %9 = vector.extract_strided_slice %8 {offsets = [0, 0], sizes = [8, 128], strides = [1, 1]} : vector<8x256xf32> to vector<8x128xf32>
    %10 = vector.extract_strided_slice %8 {offsets = [0, 128], sizes = [8, 128], strides = [1, 1]} : vector<8x256xf32> to vector<8x128xf32>
    %11 = arith.negf %9 : vector<8x128xf32>
    %12 = math.exp %11 : vector<8x128xf32>
    %cst_6 = arith.constant 1.000000e+00 : f32
    %13 = vector.broadcast %cst_6 : f32 to vector<8x128xf32>
    %14 = arith.addf %13, %12 : vector<8x128xf32>
    %15 = arith.divf %13, %14 : vector<8x128xf32>
    %16 = arith.mulf %9, %15 : vector<8x128xf32>
    %17 = arith.mulf %16, %10 : vector<8x128xf32>
    %c0_7 = arith.constant 0 : index
    %c0_8 = arith.constant 0 : index
    %18 = vector.load %arg8[%c0_7, %c0_8] : memref<8x128xf32, #tpu.memory_space<vmem>>, vector<8x128xf32>
    %c0_9 = arith.constant 0 : index
    %c0_10 = arith.constant 0 : index
    %19 = vector.load %arg5[%c0_9, %c0_10] : memref<128x128xf32, #tpu.memory_space<vmem>>, vector<128x128xf32>
    %cst_11 = arith.constant dense<0.000000e+00> : vector<8x128xf32>
    %20 = tpu.matmul %17, %19, %cst_11 {dimension_numbers = #tpu.dot_dimension_numbers<[1], [0], [0], [1], [0, 0, 1, 1], [], []>} : vector<8x128xf32>, vector<128x128xf32>, vector<8x128xf32> -> vector<8x128xf32>
    %21 = arith.addf %18, %20 : vector<8x128xf32>
    %c0_12 = arith.constant 0 : index
    %c0_13 = arith.constant 0 : index
    %22 = vector.load %arg8[%c0_12, %c0_13] : memref<8x128xf32, #tpu.memory_space<vmem>>, vector<8x128xf32>
    tpu.vector_store %arg8[%c0_12, %c0_13], %21 {strides = array<i32>} : memref<8x128xf32, #tpu.memory_space<vmem>>, vector<8x128xf32>,
    %c1_i32 = arith.constant 1 : i32
    %23 = arith.cmpi eq, %arg1, %c1_i32 : i32
    %24 = arith.extui %23 : i1 to i32
    %c0_i32_14 = arith.constant 0 : i32
    %25 = arith.cmpi ne, %24, %c0_i32_14 : i32
    scf.if %25 {
      %c0_15 = arith.constant 0 : index
      %c0_16 = arith.constant 0 : index
      %26 = vector.load %arg8[%c0_15, %c0_16] : memref<8x128xf32, #tpu.memory_space<vmem>>, vector<8x128xf32>
      %c0_17 = arith.constant 0 : index
      %c0_18 = arith.constant 0 : index
      %27 = vector.load %arg6[%c0_17, %c0_18] : memref<1x128xf32, #tpu.memory_space<vmem>>, vector<1x128xf32>
      %28 = vector.broadcast %27 : vector<1x128xf32> to vector<8x128xf32>
      %29 = arith.addf %26, %28 : vector<8x128xf32>
      %c0_19 = arith.constant 0 : index
      %c0_20 = arith.constant 0 : index
      %30 = vector.load %arg7[%c0_19, %c0_20] : memref<8x128xf32, #tpu.memory_space<vmem>>, vector<8x128xf32>
      tpu.vector_store %arg7[%c0_19, %c0_20], %29 {strides = array<i32>} : memref<8x128xf32, #tpu.memory_space<vmem>>, vector<8x128xf32>,
    } else {
    }
    return
  }
  func.func @transform_0(%arg0: i32, %arg1: i32) -> (i32, i32) {
    %c0_i32 = arith.constant 0 : i32
    %c0_i32_0 = arith.constant 0 : i32
    return %arg0, %c0_i32 : i32, i32
  }
  func.func @transform_1(%arg0: i32, %arg1: i32) -> (i32, i32) {
    %c0_i32 = arith.constant 0 : i32
    %c0_i32_0 = arith.constant 0 : i32
    return %c0_i32, %arg1 : i32, i32
  }
  func.func @transform_2(%arg0: i32, %arg1: i32) -> (i32, i32) {
    %c0_i32 = arith.constant 0 : i32
    %c0_i32_0 = arith.constant 0 : i32
    return %c0_i32, %arg1 : i32, i32
  }
  func.func @transform_3(%arg0: i32, %arg1: i32) -> (i32, i32) {
    %c0_i32 = arith.constant 0 : i32
    %c0_i32_0 = arith.constant 0 : i32
    return %arg1, %c0_i32 : i32, i32
  }
  func.func @transform_4(%arg0: i32, %arg1: i32) -> (i32, i32) {
    %c0_i32 = arith.constant 0 : i32
    %c0_i32_0 = arith.constant 0 : i32
    %c0_i32_1 = arith.constant 0 : i32
    return %c0_i32, %c0_i32_0 : i32, i32
  }
  func.func @transform_5(%arg0: i32, %arg1: i32) -> (i32, i32) {
    %c0_i32 = arith.constant 0 : i32
    %c0_i32_0 = arith.constant 0 : i32
    return %arg0, %c0_i32 : i32, i32
  }
}

</mosaic_0001>

<llo_original>
// kernel: _llama_mlp_impl.1
$region0: #{_llama_mlp_impl.1}
  #allocation0 [shape = 'u32[]', space=smem, size = 0x4, offset = 0x4, fixed_abs, tag = 'smem constant byte address 0x4 - core index']
  #allocation1 [shape = 'u32[72,128]{1,0:T(1,128)}', space=vmem, size = 0x9000, scoped, tag = 'internal scratch']
  #allocation2 [shape = 'f32[8,128]{1,0:T(8,128)}', space=vmem, size = 0x1000, scoped, tag = 'scratch operand']
  %s0 = inlined_call_operand.vmem [shape: f32[16,128], index: 0, kind: input, shape index: {}]
  %s1 = inlined_call_operand.vmem [shape: f32[128,512], index: 1, kind: input, shape index: {}]
  %s2 = inlined_call_operand.vmem [shape: f32[1,512], index: 2, kind: input, shape index: {}]
  %s3 = inlined_call_operand.vmem [shape: f32[256,128], index: 3, kind: input, shape index: {}]
  %s4 = inlined_call_operand.vmem [shape: f32[1,128], index: 4, kind: input, shape index: {}]
  %s5 = inlined_call_operand.hbm [shape: f32[16,128], index: 5, kind: output, shape index: {}]
  %s6 = sld [smem:[#allocation0]]
  $region84: #{_llama_mlp_impl.1} parent=0
    _
  %s8 = ssub.s32 1, %s6
  %s9 = scalar_select 0, %s8, %s6
  $region1: #{_llama_mlp_impl.1} parent=0
    #allocation3 [shape = 'u8[262144]{0}', space=vmem, size = 0x40000, scoped, tag = 'input window, operand 1']
    #allocation4 [shape = 'u8[8192]{0}', space=vmem, size = 0x2000, scoped, tag = 'output window, operand 0']
    #allocation5 [shape = 's32[2]{0}', space=sflag, size = 0x8, scoped, tag = 'scoped memory for _llama_mlp_impl.1']
    %10 = vsyncpa [#allocation5], 0
    %s11 = scalar_lea.sflag [#allocation5], 1
    %12 = vsyncpa %s11, 0
    loop: start=0, step=1, limit=6
    $region2: #{_llama_mlp_impl.1} parent=1 // loop_pre_header
      _
    $region3: #{_llama_mlp_impl.1} parent=1 // loop_header
      %s14 = sphi 0, %s18
      %p15 = scmp.ge.s32.totalorder %s14, 6
      %s21 = sphi 0, %s33
      %s22 = sphi 0, %s29
      %s23 = sphi 0, %s21
      %s24 = sphi 0, %s22
      %s25 = sphi 0, %s23
      %s26 = sphi 0, %s24
      %s36 = sphi 0, %s38
      %s39 = sphi 0, %s36
      %s40 = sphi 0, %s39
      %s56 = sphi 0, %s40
      %s62 = sphi 0, %s64
      %s65 = sphi 0, %s62
      %s66 = sphi 0, %s65
      %s82 = sphi 0, %s66
      %s88 = sphi 0, %s90
      %s91 = sphi 0, %s88
      %s92 = sphi 0, %s91
      %s108 = sphi 0, %s92
      %s114 = sphi 0, %s116
      %s117 = sphi 0, %s114
      %s118 = sphi 0, %s117
      %s134 = sphi 0, %s118
      %s138 = sphi 0, %s138
      %s140 = sphi 0, %s138
      %s141 = sphi 0, %s140
      %s155 = sphi 0, %s141
      %s161 = sphi 0, %s163
      %s164 = sphi 0, %s161
      %s165 = sphi 0, %s164
      %s181 = sphi 0, %s165
    $region4: #{_llama_mlp_impl.1} parent=1 // loop_header_branch
      %17 = sbr.rel (%p15) target = $region8
    $region5: #{_llama_mlp_impl.1} parent=1 // loop_body
      %s19 = ssub.s32 %s14, 1
      %s20 = ssub.s32 %s14, 2
      %s27 = sadd.s32 1, %s22
      %p28 = scmp.ge.s32.totalorder %s27, 2
      %s29 = scalar_select %p28, 0, %s27
      %s30 = sadd.s32 1, %s21
      %s31 = scalar_select %p28, %s30, %s21
      %p32 = scmp.ge.s32.totalorder %s31, 2
      %s33 = scalar_select %p32, 0, %s31
      %s34 = ssub.s32 %s21, %s33
      %p35 = scmp.eq.s32.totalorder %s34, 0
      %s37 = sadd.s32 %s36, 1
      %s38 = scalar_select %p35, %s36, %s37
      %p41 = pneg %p35
      %p42 = scmp.eq.s32.totalorder %s14, 3
      %p43 = por %p41, %p42
      %p44 = scmp.ne.s32.totalorder %s36, %s39
      %p45 = scmp.eq.s32.totalorder %s14, 0
      %p46 = por %p44, %p45
      %p47 = scmp.ne.s32.totalorder %s36, %s39
      %p48 = scmp.eq.s32.totalorder %s19, 3
      %p49 = por %p47, %p48
      %p50 = scmp.ne.s32.totalorder %s39, %s40
      %p51 = scmp.eq.s32.totalorder %s19, 0
      %p52 = por %p50, %p51
      %p53 = scmp.ne.s32.totalorder %s39, %s40
      %p54 = scmp.eq.s32.totalorder %s20, 3
      %p55 = por %p53, %p54
      %p57 = scmp.ne.s32.totalorder %s40, %s56
      %p58 = scmp.eq.s32.totalorder %s20, 0
      %p59 = por %p57, %p58
      %s60 = ssub.s32 %s22, %s29
      %p61 = scmp.eq.s32.totalorder %s60, 0
      %s63 = sadd.s32 %s62, 1
      %s64 = scalar_select %p61, %s62, %s63
      %p67 = pneg %p61
      %p68 = scmp.eq.s32.totalorder %s14, 3
      %p69 = por %p67, %p68
      %p70 = scmp.ne.s32.totalorder %s62, %s65
      %p71 = scmp.eq.s32.totalorder %s14, 0
      %p72 = por %p70, %p71
      %p73 = scmp.ne.s32.totalorder %s62, %s65
      %p74 = scmp.eq.s32.totalorder %s19, 3
      %p75 = por %p73, %p74
      %p76 = scmp.ne.s32.totalorder %s65, %s66
      %p77 = scmp.eq.s32.totalorder %s19, 0
      %p78 = por %p76, %p77
      %p79 = scmp.ne.s32.totalorder %s65, %s66
      %p80 = scmp.eq.s32.totalorder %s20, 3
      %p81 = por %p79, %p80
      %p83 = scmp.ne.s32.totalorder %s66, %s82
      %p84 = scmp.eq.s32.totalorder %s20, 0
      %p85 = por %p83, %p84
      %s86 = ssub.s32 %s22, %s29
      %p87 = scmp.eq.s32.totalorder %s86, 0
      %s89 = sadd.s32 %s88, 1
      %s90 = scalar_select %p87, %s88, %s89
      %p93 = pneg %p87
      %p94 = scmp.eq.s32.totalorder %s14, 3
      %p95 = por %p93, %p94
      %p96 = scmp.ne.s32.totalorder %s88, %s91
      %p97 = scmp.eq.s32.totalorder %s14, 0
      %p98 = por %p96, %p97
      %p99 = scmp.ne.s32.totalorder %s88, %s91
      %p100 = scmp.eq.s32.totalorder %s19, 3
      %p101 = por %p99, %p100
      %p102 = scmp.ne.s32.totalorder %s91, %s92
      %p103 = scmp.eq.s32.totalorder %s19, 0
      %p104 = por %p102, %p103
      %p105 = scmp.ne.s32.totalorder %s91, %s92
      %p106 = scmp.eq.s32.totalorder %s20, 3
      %p107 = por %p105, %p106
      %p109 = scmp.ne.s32.totalorder %s92, %s108
      %p110 = scmp.eq.s32.totalorder %s20, 0
      %p111 = por %p109, %p110
      %s112 = ssub.s32 %s22, %s29
      %p113 = scmp.eq.s32.totalorder %s112, 0
      %s115 = sadd.s32 %s114, 1
      %s116 = scalar_select %p113, %s114, %s115
      %p119 = pneg %p113
      %p120 = scmp.eq.s32.totalorder %s14, 3
      %p121 = por %p119, %p120
      %p122 = scmp.ne.s32.totalorder %s114, %s117
      %p123 = scmp.eq.s32.totalorder %s14, 0
      %p124 = por %p122, %p123
      %p125 = scmp.ne.s32.totalorder %s114, %s117
      %p126 = scmp.eq.s32.totalorder %s19, 3
      %p127 = por %p125, %p126
      %p128 = scmp.ne.s32.totalorder %s117, %s118
      %p129 = scmp.eq.s32.totalorder %s19, 0
      %p130 = por %p128, %p129
      %p131 = scmp.ne.s32.totalorder %s117, %s118
      %p132 = scmp.eq.s32.totalorder %s20, 3
      %p133 = por %p131, %p132
      %p135 = scmp.ne.s32.totalorder %s118, %s134
      %p136 = scmp.eq.s32.totalorder %s20, 0
      %p137 = por %p135, %p136
      %s139 = sadd.s32 %s138, 1
      %p142 = scmp.eq.s32.totalorder %s14, 3
      %p143 = scmp.ne.s32.totalorder %s138, %s140
      %p144 = scmp.eq.s32.totalorder %s14, 0
      %p145 = por %p143, %p144
      %p146 = scmp.ne.s32.totalorder %s138, %s140
      %p147 = scmp.eq.s32.totalorder %s19, 3
      %p148 = por %p146, %p147
      %p149 = scmp.ne.s32.totalorder %s140, %s141
      %p150 = scmp.eq.s32.totalorder %s19, 0
      %p151 = por %p149, %p150
      %p152 = scmp.ne.s32.totalorder %s140, %s141
      %p153 = scmp.eq.s32.totalorder %s20, 3
      %p154 = por %p152, %p153
      %p156 = scmp.ne.s32.totalorder %s141, %s155
      %p157 = scmp.eq.s32.totalorder %s20, 0
      %p158 = por %p156, %p157
      %s159 = ssub.s32 %s21, %s33
      %p160 = scmp.eq.s32.totalorder %s159, 0
      %s162 = sadd.s32 %s161, 1
      %s163 = scalar_select %p160, %s161, %s162
      %p166 = pneg %p160
      %p167 = scmp.eq.s32.totalorder %s14, 3
      %p168 = por %p166, %p167
      %p169 = scmp.ne.s32.totalorder %s161, %s164
      %p170 = scmp.eq.s32.totalorder %s14, 0
      %p171 = por %p169, %p170
      %p172 = scmp.ne.s32.totalorder %s161, %s164
      %p173 = scmp.eq.s32.totalorder %s19, 3
      %p174 = por %p172, %p173
      %p175 = scmp.ne.s32.totalorder %s164, %s165
      %p176 = scmp.eq.s32.totalorder %s19, 0
      %p177 = por %p175, %p176
      %p178 = scmp.ne.s32.totalorder %s164, %s165
      %p179 = scmp.eq.s32.totalorder %s20, 3
      %p180 = por %p178, %p179
      %p182 = scmp.ne.s32.totalorder %s165, %s181
      %p183 = scmp.eq.s32.totalorder %s20, 0
      %p184 = por %p182, %p183
      %p185 = scmp.le.s32.totalorder 1, %s14
      %p186 = scmp.lt.s32.totalorder %s14, 5
      %p187 = pnand %p185, %p186
      %p188 = pneg %p187
      // Predicated region
      $region9: #{_llama_mlp_impl.1} parent=5 // pred_check
        _
      $region10: #{_llama_mlp_impl.1} parent=5 // pred_check_branch
        %190 = sbr.rel (%p187) target = $region12
      $region11: #{_llama_mlp_impl.1} parent=5 // pred_region
        %s191 = ssub.s32 %s14, 1
        // Predicated region
        $region13: #{_llama_mlp_impl.1} parent=11 // pred_check
          %p192 = pneg %p151
        $region14: #{_llama_mlp_impl.1} parent=11 // pred_check_branch
          %194 = sbr.rel (%p192) target = $region16
        $region15: #{_llama_mlp_impl.1} parent=11 // pred_region
          _
        $region16: #{_llama_mlp_impl.1} parent=11 // pred_fallthru
          _
      $region12: #{_llama_mlp_impl.1} parent=5 // pred_fallthru
        _
      %p195 = scmp.lt.s32.totalorder %s14, 4
      // Predicated region
      $region17: #{_llama_mlp_impl.1} parent=5 // pred_check
        %p196 = pneg %p195
      $region18: #{_llama_mlp_impl.1} parent=5 // pred_check_branch
        %198 = sbr.rel (%p196) target = $region20
      $region19: #{_llama_mlp_impl.1} parent=5 // pred_region
        // Predicated region
        $region21: #{_llama_mlp_impl.1} parent=19 // pred_check
          %p199 = pneg %p46
        $region22: #{_llama_mlp_impl.1} parent=19 // pred_check_branch
          %201 = sbr.rel (%p199) target = $region24
        $region23: #{_llama_mlp_impl.1} parent=19 // pred_region
          %p202 = scmp.lt.s32.totalorder %s21, 1
          %s203 = scalar_select %p202, %s21, 1
          %s204 = smul.addr %s203, 8
          %s205 = scalar_lea.vmem %s0, %s204
        $region24: #{_llama_mlp_impl.1} parent=19 // pred_fallthru
          _
        // Predicated region
        $region25: #{_llama_mlp_impl.1} parent=19 // pred_check
          %p206 = pneg %p72
        $region26: #{_llama_mlp_impl.1} parent=19 // pred_check_branch
          %208 = sbr.rel (%p206) target = $region28
        $region27: #{_llama_mlp_impl.1} parent=19 // pred_region
          %s209 = sand.u32 %s62, 1
          %s210 = sand.u32 %s62, 1
          %s211 = smul.addr %s210, 256
          %s212 = scalar_lea.vmem [#allocation3], %s211
          %s213 = smul.u32 2, %s22
          %s214 = smul.addr %s213, 8
          %s215 = scalar_lea.vmem %s1, %s214
          // Predicated region
          $region29: #{_llama_mlp_impl.1} parent=27 // pred_check
            _
          $region30: #{_llama_mlp_impl.1} parent=27 // pred_check_branch
            %217 = sbr.rel (0) target = $region32
          $region31: #{_llama_mlp_impl.1} parent=27 // pred_region
            // Predicated region
            $region33: #{_llama_mlp_impl.1} parent=31 // pred_check
              _
            $region34: #{_llama_mlp_impl.1} parent=31 // pred_check_branch
              %219 = sbr.rel (0) target = $region36
            $region35: #{_llama_mlp_impl.1} parent=31 // pred_region
              loop: start=0, step=1, limit=1
              $region37: #{_llama_mlp_impl.1} parent=35 // loop_pre_header
                _
              $region38: #{_llama_mlp_impl.1} parent=35 // loop_header
                %s221 = sphi 0, %s225
                %p222 = scmp.ge.s32.totalorder %s221, 1
                %s226 = sphi %s215, %s215
                %s227 = sphi %s212, %s212
              $region39: #{_llama_mlp_impl.1} parent=35 // loop_header_branch
                %224 = sbr.rel (%p222) target = $region43
              $region40: #{_llama_mlp_impl.1} parent=35 // loop_body
                %v228 = vld [vmem:[%s226] sm:$0xff]
                %229 = vst [vmem:[%s227] sm:$0xff] %v228
                %v230 = vld [vmem:[%s226 + $0x8] sm:$0xff]
                %231 = vst [vmem:[%s227 + $0x8] sm:$0xff] %v230
                %v232 = vld [vmem:[%s226 + $0x20] sm:$0xff]
                %233 = vst [vmem:[%s227 + $0x10] sm:$0xff] %v232
                %v234 = vld [vmem:[%s226 + $0x28] sm:$0xff]
                %235 = vst [vmem:[%s227 + $0x18] sm:$0xff] %v234
                %v236 = vld [vmem:[%s226 + $0x40] sm:$0xff]
                %237 = vst [vmem:[%s227 + $0x20] sm:$0xff] %v236
                %v238 = vld [vmem:[%s226 + $0x48] sm:$0xff]
                %239 = vst [vmem:[%s227 + $0x28] sm:$0xff] %v238
                %v240 = vld [vmem:[%s226 + $0x60] sm:$0xff]
                %241 = vst [vmem:[%s227 + $0x30] sm:$0xff] %v240
                %v242 = vld [vmem:[%s226 + $0x68] sm:$0xff]
                %243 = vst [vmem:[%s227 + $0x38] sm:$0xff] %v242
                %v244 = vld [vmem:[%s226 + $0x80] sm:$0xff]
                %245 = vst [vmem:[%s227 + $0x40] sm:$0xff] %v244
                %v246 = vld [vmem:[%s226 + $0x88] sm:$0xff]
                %247 = vst [vmem:[%s227 + $0x48] sm:$0xff] %v246
                %v248 = vld [vmem:[%s226 + $0xa0] sm:$0xff]
                %249 = vst [vmem:[%s227 + $0x50] sm:$0xff] %v248
                %v250 = vld [vmem:[%s226 + $0xa8] sm:$0xff]
                %251 = vst [vmem:[%s227 + $0x58] sm:$0xff] %v250
                %v252 = vld [vmem:[%s226 + $0xc0] sm:$0xff]
                %253 = vst [vmem:[%s227 + $0x60] sm:$0xff] %v252
                %v254 = vld [vmem:[%s226 + $0xc8] sm:$0xff]
                %255 = vst [vmem:[%s227 + $0x68] sm:$0xff] %v254
                %v256 = vld [vmem:[%s226 + $0xe0] sm:$0xff]
                %257 = vst [vmem:[%s227 + $0x70] sm:$0xff] %v256
                %v258 = vld [vmem:[%s226 + $0xe8] sm:$0xff]
                %259 = vst [vmem:[%s227 + $0x78] sm:$0xff] %v258
                %v260 = vld [vmem:[%s226 + $0x100] sm:$0xff]
                %261 = vst [vmem:[%s227 + $0x80] sm:$0xff] %v260
                %v262 = vld [vmem:[%s226 + $0x108] sm:$0xff]
                %263 = vst [vmem:[%s227 + $0x88] sm:$0xff] %v262
                %v264 = vld [vmem:[%s226 + $0x120] sm:$0xff]
                %265 = vst [vmem:[%s227 + $0x90] sm:$0xff] %v264
                %v266 = vld [vmem:[%s226 + $0x128] sm:$0xff]
                %267 = vst [vmem:[%s227 + $0x98] sm:$0xff] %v266
                %v268 = vld [vmem:[%s226 + $0x140] sm:$0xff]
                %269 = vst [vmem:[%s227 + $0xa0] sm:$0xff] %v268
                %v270 = vld [vmem:[%s226 + $0x148] sm:$0xff]
                %271 = vst [vmem:[%s227 + $0xa8] sm:$0xff] %v270
                %v272 = vld [vmem:[%s226 + $0x160] sm:$0xff]
                %273 = vst [vmem:[%s227 + $0xb0] sm:$0xff] %v272
                %v274 = vld [vmem:[%s226 + $0x168] sm:$0xff]
                %275 = vst [vmem:[%s227 + $0xb8] sm:$0xff] %v274
                %v276 = vld [vmem:[%s226 + $0x180] sm:$0xff]
                %277 = vst [vmem:[%s227 + $0xc0] sm:$0xff] %v276
                %v278 = vld [vmem:[%s226 + $0x188] sm:$0xff]
                %279 = vst [vmem:[%s227 + $0xc8] sm:$0xff] %v278
                %v280 = vld [vmem:[%s226 + $0x1a0] sm:$0xff]
                %281 = vst [vmem:[%s227 + $0xd0] sm:$0xff] %v280
                %v282 = vld [vmem:[%s226 + $0x1a8] sm:$0xff]
                %283 = vst [vmem:[%s227 + $0xd8] sm:$0xff] %v282
                %v284 = vld [vmem:[%s226 + $0x1c0] sm:$0xff]
                %285 = vst [vmem:[%s227 + $0xe0] sm:$0xff] %v284
                %v286 = vld [vmem:[%s226 + $0x1c8] sm:$0xff]
                %287 = vst [vmem:[%s227 + $0xe8] sm:$0xff] %v286
                %v288 = vld [vmem:[%s226 + $0x1e0] sm:$0xff]
                %289 = vst [vmem:[%s227 + $0xf0] sm:$0xff] %v288
                %v290 = vld [vmem:[%s226 + $0x1e8] sm:$0xff]
                %291 = vst [vmem:[%s227 + $0xf8] sm:$0xff] %v290
              $region41: #{_llama_mlp_impl.1} parent=35 // loop_footer
                %s225 = sadd.s32 1, %s221
              $region42: #{_llama_mlp_impl.1} parent=35 // loop_footer_branch
                %220 = sbr.rel target = $region38
              $region43: #{_llama_mlp_impl.1} parent=35 // loop_exit
                _
            $region36: #{_llama_mlp_impl.1} parent=31 // pred_fallthru
              _
            // Predicated region
            $region44: #{_llama_mlp_impl.1} parent=31 // pred_check
              _
            $region45: #{_llama_mlp_impl.1} parent=31 // pred_check_branch
              %293 = sbr.rel target = $region47
            $region46: #{_llama_mlp_impl.1} parent=31 // pred_region
              _
            $region47: #{_llama_mlp_impl.1} parent=31 // pred_fallthru
              _
          $region32: #{_llama_mlp_impl.1} parent=27 // pred_fallthru
            _
          %294 = vnop
        $region28: #{_llama_mlp_impl.1} parent=19 // pred_fallthru
          _
        // Predicated region
        $region48: #{_llama_mlp_impl.1} parent=19 // pred_check
          %p295 = pneg %p98
        $region49: #{_llama_mlp_impl.1} parent=19 // pred_check_branch
          %297 = sbr.rel (%p295) target = $region51
        $region50: #{_llama_mlp_impl.1} parent=19 // pred_region
          %s298 = smul.u32 2, %s22
          %p299 = scmp.lt.s32.totalorder %s298, 3
          %s300 = scalar_select %p299, %s298, 3
          %s301 = scalar_lea.vmem %s2, %s300
          %s302 = smul.u32 2, %s22
        $region51: #{_llama_mlp_impl.1} parent=19 // pred_fallthru
          _
        // Predicated region
        $region52: #{_llama_mlp_impl.1} parent=19 // pred_check
          %p303 = pneg %p124
        $region53: #{_llama_mlp_impl.1} parent=19 // pred_check_branch
          %305 = sbr.rel (%p303) target = $region55
        $region54: #{_llama_mlp_impl.1} parent=19 // pred_region
          %s306 = smul.u32 16, %s22
          %p307 = scmp.lt.s32.totalorder %s306, 31
          %s308 = scalar_select %p307, %s306, 31
          %s309 = smul.addr %s308, 8
          %s310 = scalar_lea.vmem %s3, %s309
          %s311 = smul.u32 16, %s22
        $region55: #{_llama_mlp_impl.1} parent=19 // pred_fallthru
          _
      $region20: #{_llama_mlp_impl.1} parent=5 // pred_fallthru
        _
      %p312 = scmp.le.s32.totalorder 1, %s14
      %p313 = scmp.lt.s32.totalorder %s14, 5
      %p314 = pnand %p312, %p313
      %p315 = pneg %p314
      // Predicated region
      $region56: #{_llama_mlp_impl.1} parent=5 // pred_check
        _
      $region57: #{_llama_mlp_impl.1} parent=5 // pred_check_branch
        %317 = sbr.rel (%p314) target = $region59
      $region58: #{_llama_mlp_impl.1} parent=5 // pred_region
        %s318 = ssub.s32 %s14, 1
        %s319 = sand.u32 %s65, 1
        %s320 = sand.u32 %s65, 1
        %s321 = smul.addr %s320, 256
        %s322 = scalar_lea.vmem [#allocation3], %s321
        // Predicated region
        $region60: #{_llama_mlp_impl.1} parent=58 // pred_check
          %p323 = pneg %p78
        $region61: #{_llama_mlp_impl.1} parent=58 // pred_check_branch
          %325 = sbr.rel (%p323) target = $region63
        $region62: #{_llama_mlp_impl.1} parent=58 // pred_region
          _
        $region63: #{_llama_mlp_impl.1} parent=58 // pred_fallthru
          _
        %p326 = scmp.lt.s32.totalorder %s23, 1
        %s327 = scalar_select %p326, %s23, 1
        %s328 = smul.addr %s327, 8
        %s329 = scalar_lea.vmem %s0, %s328
        %p330 = pneg %p52
        %p331 = pneg %p49
        %s332 = sand.u32 %s65, 1
        %s333 = sand.u32 %s65, 1
        %s334 = smul.addr %s333, 256
        %s335 = scalar_lea.vmem [#allocation3], %s334
        %p336 = pneg %p78
        %p337 = pneg %p75
        %s338 = smul.u32 2, %s24
        %p339 = scmp.lt.s32.totalorder %s338, 3
        %s340 = scalar_select %p339, %s338, 3
        %s341 = scalar_lea.vmem %s2, %s340
        %p342 = pneg %p104
        %p343 = pneg %p101
        %s344 = smul.u32 16, %s24
        %p345 = scmp.lt.s32.totalorder %s344, 31
        %s346 = scalar_select %p345, %s344, 31
        %s347 = smul.addr %s346, 8
        %s348 = scalar_lea.vmem %s3, %s347
        %p349 = pneg %p130
        %p350 = pneg %p127
        %p351 = pneg %p151
        %p352 = pneg %p148
        %p353 = pneg %p177
        %p354 = pneg %p174
        %s355 = sand.u32 %s164, 1
        %s356 = scalar_lea.sflag [#allocation5], %s355
        %s357 = sand.u32 %s164, 1
        %s358 = smul.addr %s357, 8
        %s359 = scalar_lea.vmem [#allocation4], %s358
        %p360 = scmp.lt.s32.totalorder %s23, 1
        %s361 = scalar_select %p360, %s23, 1
        %s362 = smul.addr %s361, 8
        %s363 = scalar_lea.vmem %s0, %s362
        %s364 = smul.u32 2, %s24
        %s365 = smul.u32 2, %s24
        %p366 = scmp.lt.s32.totalorder %s365, 3
        %s367 = scalar_select %p366, %s365, 3
        %s368 = scalar_lea.vmem %s2, %s367
        %s369 = smul.u32 2, %s24
        %s370 = smul.u32 16, %s24
        %p371 = scmp.lt.s32.totalorder %s370, 31
        %s372 = scalar_select %p371, %s370, 31
        %s373 = smul.addr %s372, 8
        %s374 = scalar_lea.vmem %s3, %s373
        %s375 = smul.u32 16, %s24
        %p376 = scmp.eq.s32.totalorder %s24, 0
        // Predicated region
        $region64: #{_llama_mlp_impl.1} parent=58 // pred_check
          %p377 = pneg %p376
        $region65: #{_llama_mlp_impl.1} parent=58 // pred_check_branch
          %379 = sbr.rel (%p377) target = $region67
        $region66: #{_llama_mlp_impl.1} parent=58 // pred_region
          %380 = vst [vmem:[#allocation2] sm:$0xff] 0.0
        $region67: #{_llama_mlp_impl.1} parent=58 // pred_fallthru
          _
        %v381 = vld [vmem:[%s363] sm:$0xff]
        %v382 = vld [vmem:[%s322] sm:$0xff]
        %v383 = vld [vmem:[%s322 + $0x8] sm:$0xff]
        %v384 = vld [vmem:[%s322 + $0x10] sm:$0xff]
        %v385 = vld [vmem:[%s322 + $0x18] sm:$0xff]
        %v386 = vld [vmem:[%s322 + $0x20] sm:$0xff]
        %v387 = vld [vmem:[%s322 + $0x28] sm:$0xff]
        %v388 = vld [vmem:[%s322 + $0x30] sm:$0xff]
        %v389 = vld [vmem:[%s322 + $0x38] sm:$0xff]
        %v390 = vld [vmem:[%s322 + $0x40] sm:$0xff]
        %v391 = vld [vmem:[%s322 + $0x48] sm:$0xff]
        %v392 = vld [vmem:[%s322 + $0x50] sm:$0xff]
        %v393 = vld [vmem:[%s322 + $0x58] sm:$0xff]
        %v394 = vld [vmem:[%s322 + $0x60] sm:$0xff]
        %v395 = vld [vmem:[%s322 + $0x68] sm:$0xff]
        %v396 = vld [vmem:[%s322 + $0x70] sm:$0xff]
        %v397 = vld [vmem:[%s322 + $0x78] sm:$0xff]
        %v398 = vld [vmem:[%s322 + $0x80] sm:$0xff]
        %v399 = vld [vmem:[%s322 + $0x88] sm:$0xff]
        %v400 = vld [vmem:[%s322 + $0x90] sm:$0xff]
        %v401 = vld [vmem:[%s322 + $0x98] sm:$0xff]
        %v402 = vld [vmem:[%s322 + $0xa0] sm:$0xff]
        %v403 = vld [vmem:[%s322 + $0xa8] sm:$0xff]
        %v404 = vld [vmem:[%s322 + $0xb0] sm:$0xff]
        %v405 = vld [vmem:[%s322 + $0xb8] sm:$0xff]
        %v406 = vld [vmem:[%s322 + $0xc0] sm:$0xff]
        %v407 = vld [vmem:[%s322 + $0xc8] sm:$0xff]
        %v408 = vld [vmem:[%s322 + $0xd0] sm:$0xff]
        %v409 = vld [vmem:[%s322 + $0xd8] sm:$0xff]
        %v410 = vld [vmem:[%s322 + $0xe0] sm:$0xff]
        %v411 = vld [vmem:[%s322 + $0xe8] sm:$0xff]
        %v412 = vld [vmem:[%s322 + $0xf0] sm:$0xff]
        %v413 = vld [vmem:[%s322 + $0xf8] sm:$0xff]
        %v414 = vld [vmem:[%s368] sm:$0x3]
        %v416 = vperm.slane %v414, 0
        %v417 = vperm.slane %v414, 1
        %420 = vmatpush.msra.mxu0 %v412
        %421 = vmatpush.msra.mxu0 %v410
        %422 = vmatpush.msra.mxu0 %v408
        %423 = vmatpush.msra.mxu0 %v406
        %424 = vmatpush.msra.mxu0 %v404
        %425 = vmatpush.msra.mxu0 %v402
        %426 = vmatpush.msra.mxu0 %v400
        %427 = vmatpush.msra.mxu0 %v398
        %428 = vmatpush.msra.mxu0 %v396
        %429 = vmatpush.msra.mxu0 %v394
        %430 = vmatpush.msra.mxu0 %v392
        %431 = vmatpush.msra.mxu0 %v390
        %432 = vmatpush.msra.mxu0 %v388
        %433 = vmatpush.msra.mxu0 %v386
        %434 = vmatpush.msra.mxu0 %v384
        %435 = vmatpush.msra.mxu0 %v382
        %436 = vmatmul.f32.gmra.mxu0 %v381
        %v437 = vpop.f32.mrf.mxu0
        %v438 = vadd.f32 %v416, %v437
        %439 = vdwg.mxu0
        %440 = vmatpush.msra.mxu0 %v413
        %441 = vmatpush.msra.mxu0 %v411
        %442 = vmatpush.msra.mxu0 %v409
        %443 = vmatpush.msra.mxu0 %v407
        %444 = vmatpush.msra.mxu0 %v405
        %445 = vmatpush.msra.mxu0 %v403
        %446 = vmatpush.msra.mxu0 %v401
        %447 = vmatpush.msra.mxu0 %v399
        %448 = vmatpush.msra.mxu0 %v397
        %449 = vmatpush.msra.mxu0 %v395
        %450 = vmatpush.msra.mxu0 %v393
        %451 = vmatpush.msra.mxu0 %v391
        %452 = vmatpush.msra.mxu0 %v389
        %453 = vmatpush.msra.mxu0 %v387
        %454 = vmatpush.msra.mxu0 %v385
        %455 = vmatpush.msra.mxu0 %v383
        %456 = vmatmul.f32.gmra.mxu0 %v381
        %v457 = vpop.f32.mrf.mxu0
        %v458 = vadd.f32 %v417, %v457
        %459 = vdwg.mxu0
        %v460 = vxor.u32 %v438, 2147483648
        %v461 = vmul.f32 %v460, 1.442695
        %v462 = vpow.pop %v461
        %v463 = vadd.f32 %v462, 1.0
        %v464 = vrcp.pop %v463
        %v465 = vmul.f32 %v463, %v464
        %v466 = vsub.f32 1.0, %v465
        %v467 = vmul.f32 %v464, %v466
        %v468 = vadd.f32 %v464, %v467
        %vm469 = vweird.f32 %v463
        %vm470 = vweird.f32 %v464
        %vm471 = vmor %vm469, %vm470
        %v472 = vsel %vm471, %v464, %v468
        %v473 = vand.u32 2147483647, %v463
        %vm474 = vcmp.eq.f32.partialorder %v473, 8.507059e+37
        %v475 = vand.u32 %v463, 2147483648
        %v476 = vor.u32 1.1754944e-38, %v475
        %v477 = vsel %vm474, %v476, %v472
        %v478 = vmul.f32 1.0, %v477
        %v479 = vmul.f32 %v438, %v478
        %v480 = vmul.f32 %v479, %v458
        %v481 = vld [vmem:[#allocation2] sm:$0xff]
        %v482 = vld [vmem:[%s374] sm:$0xff]
        %v483 = vld [vmem:[%s374 + $0x8] sm:$0xff]
        %v484 = vld [vmem:[%s374 + $0x10] sm:$0xff]
        %v485 = vld [vmem:[%s374 + $0x18] sm:$0xff]
        %v486 = vld [vmem:[%s374 + $0x20] sm:$0xff]
        %v487 = vld [vmem:[%s374 + $0x28] sm:$0xff]
        %v488 = vld [vmem:[%s374 + $0x30] sm:$0xff]
        %v489 = vld [vmem:[%s374 + $0x38] sm:$0xff]
        %v490 = vld [vmem:[%s374 + $0x40] sm:$0xff]
        %v491 = vld [vmem:[%s374 + $0x48] sm:$0xff]
        %v492 = vld [vmem:[%s374 + $0x50] sm:$0xff]
        %v493 = vld [vmem:[%s374 + $0x58] sm:$0xff]
        %v494 = vld [vmem:[%s374 + $0x60] sm:$0xff]
        %v495 = vld [vmem:[%s374 + $0x68] sm:$0xff]
        %v496 = vld [vmem:[%s374 + $0x70] sm:$0xff]
        %v497 = vld [vmem:[%s374 + $0x78] sm:$0xff]
        %498 = vmatpush.msra.mxu0 %v497
        %499 = vmatpush.msra.mxu0 %v496
        %500 = vmatpush.msra.mxu0 %v495
        %501 = vmatpush.msra.mxu0 %v494
        %502 = vmatpush.msra.mxu0 %v493
        %503 = vmatpush.msra.mxu0 %v492
        %504 = vmatpush.msra.mxu0 %v491
        %505 = vmatpush.msra.mxu0 %v490
        %506 = vmatpush.msra.mxu0 %v489
        %507 = vmatpush.msra.mxu0 %v488
        %508 = vmatpush.msra.mxu0 %v487
        %509 = vmatpush.msra.mxu0 %v486
        %510 = vmatpush.msra.mxu0 %v485
        %511 = vmatpush.msra.mxu0 %v484
        %512 = vmatpush.msra.mxu0 %v483
        %513 = vmatpush.msra.mxu0 %v482
        %514 = vmatmul.f32.gmra.mxu0 %v480
        %v515 = vpop.f32.mrf.mxu0
        %v516 = vadd.f32 0.0, %v515
        %517 = vdwg.mxu0
        %v518 = vadd.f32 %v481, %v516
        %519 = vst [vmem:[#allocation2] sm:$0xff] %v518
        %p520 = scmp.eq.s32.totalorder %s24, 1
        // Predicated region
        $region68: #{_llama_mlp_impl.1} parent=58 // pred_check
          %p521 = pneg %p520
        $region69: #{_llama_mlp_impl.1} parent=58 // pred_check_branch
          %523 = sbr.rel (%p521) target = $region71
        $region70: #{_llama_mlp_impl.1} parent=58 // pred_region
          %v524 = vld [vmem:[#allocation2] sm:$0xff]
          %v525 = vld [vmem:[%s4] sm:$0x1]
          %v527 = vperm.slane %v525, 0
          %v529 = vadd.f32 %v524, %v527
          %530 = vst [vmem:[%s359] sm:$0xff] %v529
        $region71: #{_llama_mlp_impl.1} parent=58 // pred_fallthru
          _
        %s531 = sand.u32 %s164, 1
        %s532 = scalar_lea.sflag [#allocation5], %s531
        %s533 = sand.u32 %s164, 1
        %s534 = smul.addr %s533, 8
        %s535 = scalar_lea.vmem [#allocation4], %s534
        // Predicated region
        $region72: #{_llama_mlp_impl.1} parent=58 // pred_check
          %p536 = pneg %p174
        $region73: #{_llama_mlp_impl.1} parent=58 // pred_check_branch
          %538 = sbr.rel (%p536) target = $region75
        $region74: #{_llama_mlp_impl.1} parent=58 // pred_region
          %540 = vsyncadd %s532, 0
          %s541 = smul.addr %s23, 8
          %s542 = scalar_lea.hbm %s5, %s541
          %s544 = sshll.u32 %s535, 4
          %s545 = int_to_ptr.vmem [resolvable:$true] %s544
          %s546 = sshll.u32 %s542, 4
          %s547 = int_to_ptr.hbm [resolvable:$true] %s546
          %549 = dma.vmem_to_hbm [thread:$0]  %s545, 128, %s547, %s532
        $region75: #{_llama_mlp_impl.1} parent=58 // pred_fallthru
          _
      $region59: #{_llama_mlp_impl.1} parent=5 // pred_fallthru
        _
      %p550 = scmp.le.s32.totalorder 2, %s14
      // Predicated region
      $region76: #{_llama_mlp_impl.1} parent=5 // pred_check
        %p551 = pneg %p550
      $region77: #{_llama_mlp_impl.1} parent=5 // pred_check_branch
        %553 = sbr.rel (%p551) target = $region79
      $region78: #{_llama_mlp_impl.1} parent=5 // pred_region
        %s554 = ssub.s32 %s14, 2
        // Predicated region
        $region80: #{_llama_mlp_impl.1} parent=78 // pred_check
          %p555 = pneg %p180
        $region81: #{_llama_mlp_impl.1} parent=78 // pred_check_branch
          %557 = sbr.rel (%p555) target = $region83
        $region82: #{_llama_mlp_impl.1} parent=78 // pred_region
          %s558 = sand.u32 %s165, 1
          %s559 = scalar_lea.sflag [#allocation5], %s558
          %s560 = sand.u32 %s165, 1
          %s561 = smul.addr %s560, 8
          %s562 = scalar_lea.vmem [#allocation4], %s561
          %564 = dma.done %s559, 128
        $region83: #{_llama_mlp_impl.1} parent=78 // pred_fallthru
          _
      $region79: #{_llama_mlp_impl.1} parent=5 // pred_fallthru
        _
    $region6: #{_llama_mlp_impl.1} parent=1 // loop_footer
      %s18 = sadd.s32 1, %s14
    $region7: #{_llama_mlp_impl.1} parent=1 // loop_footer_branch
      %13 = sbr.rel target = $region3
    $region8: #{_llama_mlp_impl.1} parent=1 // loop_exit
      _
    %565 = vsyncpa [#allocation5], 1
    %s566 = scalar_lea.sflag [#allocation5], 1
    %567 = vsyncpa %s566, 1

</llo_original>
